<compile_context>
chip_gen: v6e
topology: v6e:2x2x1
jax: 0.10.0
libtpu: 0.0.40
codegen_flags: <defaults>
</compile_context>

<pallas_src>
import functools
import math

import jax
import jax.numpy as jnp
from jax import lax
from jax.experimental import pallas as pl
from jax.experimental.pallas import tpu as pltpu

_NORM_EPS = 1e-12                      # matches torch F.normalize default eps


def _round_up(x, m):
    return ((x + m - 1) // m) * m


def _tpu_budget():
    """(tile_b, vmem_limit_bytes) chosen per TPU generation.

    v7x has only 64 MiB physical VMEM per TensorCore -> smaller row tiles and a
    limit that leaves headroom for Mosaic internal scratch; v5e/v6e have
    128 MiB -> bigger tiles (fills the 256-row MXU on v6e) and a ~100 MiB cap.
    """
    vmem_phys = None
    try:
        vmem_phys = int(getattr(pltpu.get_tpu_info(), "vmem_capacity_bytes"))
    except Exception:
        vmem_phys = None
    if vmem_phys is None:
        try:
            kind = jax.devices()[0].device_kind.lower()
        except Exception:
            kind = ""
        vmem_phys = (64 if ("v7" in kind or "7x" in kind) else 128) * 1024 * 1024
    if vmem_phys <= 64 * 1024 * 1024:
        return 128, 48 * 1024 * 1024
    return 256, 100 * 1024 * 1024


# ---------------------------------------------------------------------------
# Kernel 1: row-wise L2 normalize of the GATHERED rows only (not the table).
# ---------------------------------------------------------------------------
def _l2_normalize_kernel(x_ref, *o_refs):
    x = x_ref[...]
    inv = lax.rsqrt(jnp.maximum(jnp.sum(x * x, axis=1, keepdims=True),
                                _NORM_EPS * _NORM_EPS))
    xn = x * inv                                   # zero-padded rows stay zero
    for o_ref in o_refs:
        o_ref[...] = xn.astype(o_ref.dtype)


def _normalize_rows(x, out_dtypes, vmem_limit):
    rows, d = x.shape                              # both multiples of 128
    tile = math.gcd(rows, 512)
    spec = pl.BlockSpec((tile, d), lambda i: (i, 0))
    return pl.pallas_call(
        _l2_normalize_kernel,
        out_shape=tuple(jax.ShapeDtypeStruct((rows, d), dt) for dt in out_dtypes),
        grid=(rows // tile,),
        in_specs=[spec],
        out_specs=tuple(spec for _ in out_dtypes),
        compiler_params=pltpu.CompilerParams(
            dimension_semantics=("parallel",),
            vmem_limit_bytes=vmem_limit),
    )(x)


# ---------------------------------------------------------------------------
# Kernel 2: fused main + global-negative NCA terms, tiled over the batch axis.
# All per-tile results are grid-indexed outputs -> the axis is "parallel".
# ---------------------------------------------------------------------------
def _nt_dot(a, b):
    # (M, K) x (N, K) -> (M, N): MXU-native "NT" matmul, f32 accumulation.
    return lax.dot_general(a, b, (((1,), (1,)), ((), ())),
                           preferred_element_type=jnp.float32)


def _nca_tile_kernel(*refs, alpha, beta, c0, bsize, pad_cols, nvalid,
                     n_pad_neg, tile_b, has_neg):
    if has_neg:
        (im_ref, s_tile_ref, s_all_ref, neg_im_ref, neg_s_ref,
         acc_ref, colm_ref, diag_ref, c1_ref, c2_ref) = refs
    else:
        (im_ref, s_tile_ref, s_all_ref,
         acc_ref, colm_ref, diag_ref) = refs

    i = pl.program_id(0)

    im_t = im_ref[...]                              # (tile_b, D) f32, unit rows
    s_t = s_tile_ref[...]                           # (tile_b, D) f32, unit rows

    # alpha folded into the bf16 LHS: exp(alpha*(x - ep)) == c0 * exp(alpha*x),
    # so the big tiles only see MXU matmul + EUP exp.
    im_a = (alpha * im_t).astype(jnp.bfloat16)
    s_t_bf = s_t.astype(jnp.bfloat16)

    # Diagonal:
    #   diag_exact: exact f32 dot for the -beta*log(1+relu(diag)) term.
    #   diag_mm:    same bf16 rounding as the MXU operands, so exp(diag_mm)
    #               cancels the matmul's own diagonal contribution.
    diag_exact = jnp.sum(im_t * s_t, axis=1, keepdims=True)          # (tile_b,1)
    diag_mm = jnp.sum(im_a.astype(jnp.float32) * s_t_bf.astype(jnp.float32),
                      axis=1, keepdims=True)
    diag_e = jnp.exp(diag_mm)
    diag_ref[...] = diag_e                          # grid-indexed (tile_b,1) block

    # Main scores: bf16 MXU matmul (f32 accumulate) + exp, nothing else.
    p = jnp.exp(_nt_dot(im_a, s_all_ref[...]))                       # (tile_b,b_pad)
    colm_ref[...] = jnp.sum(p, axis=0, keepdims=True).reshape(1, 1, p.shape[1])

    # Rows: the diagonal and the zero-padded columns (each contributes
    # exp(0)=1) are removed by exact subtraction; the folded constant c0 is
    # applied only to the small (tile_b, 1) vector.
    row_raw = jnp.sum(p, axis=1, keepdims=True)
    row_main = c0 * (row_raw - diag_e - pad_cols)
    per_row = (jnp.log(1.0 + row_main) / alpha
               - beta * jnp.log(1.0 + jnp.maximum(diag_exact, 0.0)))

    row_ids = i * tile_b + lax.broadcasted_iota(jnp.int32, (tile_b, 1), 0)
    rvalid = row_ids < bsize                        # only a (tile_b,1) mask
    acc = jnp.sum(jnp.where(rvalid, per_row, 0.0),
                  axis=(0, 1), keepdims=True) / bsize

    if has_neg:
        s_a = (alpha * s_t).astype(jnp.bfloat16)
        q1 = jnp.exp(_nt_dot(im_a, neg_im_ref[...]))                 # (tile_b,n_pad)
        q2 = jnp.exp(_nt_dot(s_a, neg_s_ref[...]))
        c1_ref[...] = jnp.sum(q1, axis=0, keepdims=True).reshape(1, 1, q1.shape[1])
        c2_ref[...] = jnp.sum(q2, axis=0, keepdims=True).reshape(1, 1, q2.shape[1])
        # Zero-padded negative columns each contribute exp(0)=1.
        r1 = c0 * (jnp.sum(q1, axis=1, keepdims=True) - n_pad_neg)
        r2 = c0 * (jnp.sum(q2, axis=1, keepdims=True) - n_pad_neg)
        neg_rows = (jnp.log(1.0 + r1) + jnp.log(1.0 + r2)) / alpha
        acc = acc + jnp.sum(jnp.where(rvalid, neg_rows, 0.0),
                            axis=(0, 1), keepdims=True) / nvalid

    acc_ref[...] = acc.reshape(1, 1, 1)


# ---------------------------------------------------------------------------
# Kernel 3: reduce per-tile partials + column-side log terms (tiny, one block).
# ---------------------------------------------------------------------------
def _nca_finalize_kernel(*refs, alpha, c0, bsize, nvalid, pad_rows, has_neg):
    if has_neg:
        acc_ref, colm_ref, diag_ref, c1_ref, c2_ref, out_ref = refs
    else:
        acc_ref, colm_ref, diag_ref, out_ref = refs

    loss = jnp.sum(acc_ref[...], axis=(0, 1), keepdims=True)          # (1,1)

    col_total = jnp.sum(colm_ref[...], axis=0, keepdims=True)         # (1,b_pad)
    jcol = lax.broadcasted_iota(jnp.int32, col_total.shape, 1)
    cvalid = jcol < bsize
    # Remove the diagonal and the padded rows' exp(0)=1 contributions exactly,
    # then apply the folded constant c0.
    col_corr = jnp.where(cvalid,
                         c0 * (col_total - diag_ref[...] - pad_rows), 0.0)
    loss = loss + jnp.sum(jnp.log(1.0 + col_corr), axis=(0, 1),
                          keepdims=True) / (alpha * bsize)

    if has_neg:
        c1_tot = jnp.sum(c1_ref[...], axis=0, keepdims=True)
        c2_tot = jnp.sum(c2_ref[...], axis=0, keepdims=True)
        jneg = lax.broadcasted_iota(jnp.int32, c1_tot.shape, 1)
        nvmask = jneg < nvalid
        c1c = jnp.where(nvmask, c0 * (c1_tot - pad_rows), 0.0)
        c2c = jnp.where(nvmask, c0 * (c2_tot - pad_rows), 0.0)
        loss = loss + jnp.sum(jnp.log(1.0 + c1c) + jnp.log(1.0 + c2c),
                              axis=(0, 1), keepdims=True) / (alpha * nvalid)
    out_ref[...] = loss


def _full_spec(shape):
    return pl.BlockSpec(shape, lambda: tuple(0 for _ in shape))


# ---------------------------------------------------------------------------
# Wrapper: JAX/Pallas equivalent of NCA_loss(alpha, beta, ep).forward(...)
# ---------------------------------------------------------------------------
def nca_loss(emb, train_links, test_links, *, alpha, beta, ep,
             sample_key=None, num_neg_samples=4500):
    emb = jnp.asarray(emb, jnp.float32)
    train_links = jnp.asarray(train_links)
    num_ent, dim = emb.shape
    d_pad = _round_up(dim, 128)                    # lane-pad the embedding dim

    tile_b, vmem_limit = _tpu_budget()

    bsize = int(train_links.shape[0])
    tile_b = min(tile_b, _round_up(bsize, 128))    # MXU-aligned row tiles
    b_pad = _round_up(bsize, tile_b)
    n_tiles = b_pad // tile_b
    pad_rows = b_pad - bsize
    c0 = math.exp(-float(alpha) * float(ep))       # exp(alpha*(0 - ep))

    # Gather the raw link rows (XLA gather), zero-pad, and L2-normalize ONLY
    # the gathered rows (the whole-table normalize was pure HBM traffic for
    # large entity tables).  Padded rows stay exactly zero after normalization.
    im_raw = jnp.pad(emb[train_links[:, 0]], ((0, pad_rows), (0, d_pad - dim)))
    s_raw = jnp.pad(emb[train_links[:, 1]], ((0, pad_rows), (0, d_pad - dim)))
    (im_n,) = _normalize_rows(im_raw, (jnp.float32,), vmem_limit)
    s_n, s_bf = _normalize_rows(s_raw, (jnp.float32, jnp.bfloat16), vmem_limit)

    has_neg = (test_links is not None) and (int(test_links.shape[0]) != 0)
    nvalid, n_pad, n_pad_neg = 1, 0, 0
    neg_im_bf = neg_s_bf = None
    if has_neg:
        test_links = jnp.asarray(test_links)
        nvalid = min(int(num_neg_samples), int(test_links.shape[0]))
        # TODO(synk): host-side random.sample has no in-kernel equivalent; a
        # jax.random.permutation in glue keeps the same sampling semantics.
        if sample_key is None:
            sample_key = jax.random.PRNGKey(0)
        perm = jax.random.permutation(sample_key, test_links.shape[0])[:nvalid]
        sampled = test_links[perm]
        n_pad = _round_up(nvalid, 128)
        n_pad_neg = n_pad - nvalid
        neg_im_raw = jnp.pad(emb[sampled[:, 1]], ((0, n_pad_neg), (0, d_pad - dim)))
        neg_s_raw = jnp.pad(emb[sampled[:, 0]], ((0, n_pad_neg), (0, d_pad - dim)))
        (neg_im_bf,) = _normalize_rows(neg_im_raw, (jnp.bfloat16,), vmem_limit)
        (neg_s_bf,) = _normalize_rows(neg_s_raw, (jnp.bfloat16,), vmem_limit)

    kernel = functools.partial(
        _nca_tile_kernel, alpha=float(alpha), beta=float(beta), c0=c0,
        bsize=bsize, pad_cols=float(pad_rows), nvalid=nvalid,
        n_pad_neg=float(n_pad_neg), tile_b=tile_b, has_neg=has_neg)

    def _resident_spec(shape, buffered):
        index_map = lambda i: (0,) * len(shape)
        if buffered:
            # Grid-invariant operand: a single VMEM copy instead of the default
            # double buffer (halves resident VMEM, matters on v7x's 64 MiB).
            return pl.BlockSpec(shape, index_map, pipeline_mode=pl.Buffered(1))
        return pl.BlockSpec(shape, index_map)

    def _run(buffered):
        args = [im_n, s_n, s_bf]
        in_specs = [
            pl.BlockSpec((tile_b, d_pad), lambda i: (i, 0)),   # im row tile (f32)
            pl.BlockSpec((tile_b, d_pad), lambda i: (i, 0)),   # matching s tile (f32)
            _resident_spec((b_pad, d_pad), buffered),          # full s (bf16), resident
        ]
        out_shapes = [
            jax.ShapeDtypeStruct((n_tiles, 1, 1), jnp.float32),      # row-term partials
            jax.ShapeDtypeStruct((n_tiles, 1, b_pad), jnp.float32),  # main col partials
            jax.ShapeDtypeStruct((b_pad, 1), jnp.float32),           # exp(alpha*diag)
        ]
        out_specs = [
            pl.BlockSpec((1, 1, 1), lambda i: (i, 0, 0)),
            pl.BlockSpec((1, 1, b_pad), lambda i: (i, 0, 0)),
            pl.BlockSpec((tile_b, 1), lambda i: (i, 0)),
        ]
        if has_neg:
            args += [neg_im_bf, neg_s_bf]
            in_specs += [_resident_spec((n_pad, d_pad), buffered),
                         _resident_spec((n_pad, d_pad), buffered)]
            out_shapes += [jax.ShapeDtypeStruct((n_tiles, 1, n_pad), jnp.float32),
                           jax.ShapeDtypeStruct((n_tiles, 1, n_pad), jnp.float32)]
            out_specs += [pl.BlockSpec((1, 1, n_pad), lambda i: (i, 0, 0)),
                          pl.BlockSpec((1, 1, n_pad), lambda i: (i, 0, 0))]
        return pl.pallas_call(
            kernel,
            out_shape=tuple(out_shapes),
            grid=(n_tiles,),
            in_specs=in_specs,
            out_specs=tuple(out_specs),
            # All per-tile outputs are grid-indexed (no revisited accumulator),
            # so the B-tile axis is "parallel" -> shardable across v7x's 2 TCs.
            compiler_params=pltpu.CompilerParams(
                dimension_semantics=("parallel",),
                vmem_limit_bytes=vmem_limit),
        )(*args)

    try:
        outs = _run(True)
    except Exception:              # pl.Buffered(1) unsupported -> default buffering
        outs = _run(False)

    if has_neg:
        acc_p, colm_p, diag_col, c1_p, c2_p = outs
    else:
        acc_p, colm_p, diag_col = outs

    # Tiny layout glue (XLA) feeding the finalize kernel.
    fin_args = [acc_p.reshape(n_tiles, 1),
                colm_p.reshape(n_tiles, b_pad),
                diag_col.reshape(1, b_pad)]
    if has_neg:
        fin_args += [c1_p.reshape(n_tiles, n_pad), c2_p.reshape(n_tiles, n_pad)]

    fin_kernel = functools.partial(
        _nca_finalize_kernel, alpha=float(alpha), c0=c0, bsize=bsize,
        nvalid=nvalid, pad_rows=float(pad_rows), has_neg=has_neg)
    loss = pl.pallas_call(
        fin_kernel,
        out_shape=jax.ShapeDtypeStruct((1, 1), jnp.float32),
        in_specs=[_full_spec(tuple(a.shape)) for a in fin_args],
        out_specs=_full_spec((1, 1)),
        compiler_params=pltpu.CompilerParams(vmem_limit_bytes=vmem_limit),
    )(*fin_args)
    return loss[0, 0]


# ---------------------------------------------------------------------------
# Pure-JAX reference mirroring the PyTorch forward (for sanity check).
# ---------------------------------------------------------------------------
def nca_loss_ref(emb, train_links, sampled_test_links, alpha, beta, ep):
    embn = emb / jnp.maximum(jnp.linalg.norm(emb, axis=1, keepdims=True), _NORM_EPS)
    im = embn[train_links[:, 0]]
    s = embn[train_links[:, 1]]
    bsize = im.shape[0]
    scores = im @ s.T
    eye = jnp.eye(bsize, dtype=scores.dtype)
    s_diag = eye * scores
    S_ = jnp.exp(alpha * (scores - ep))
    S_ = S_ - S_ * eye
    loss_diag = -jnp.log(1.0 + jax.nn.relu(s_diag.sum(0)))
    loss = jnp.sum(jnp.log(1.0 + S_.sum(0)) / alpha
                   + jnp.log(1.0 + S_.sum(1)) / alpha
                   + loss_diag * beta) / bsize
    if sampled_test_links is not None and sampled_test_links.shape[0] != 0:
        n = sampled_test_links.shape[0]
        im_neg = im @ embn[sampled_test_links[:, 1]].T
        s_neg = s @ embn[sampled_test_links[:, 0]].T
        S1 = jnp.exp(alpha * (im_neg - ep))
        S2 = jnp.exp(alpha * (s_neg - ep))
        lg = (jnp.sum(jnp.log(1.0 + S1.sum(0)) / alpha + jnp.log(1.0 + S2.sum(0)) / alpha)
              + jnp.sum(jnp.log(1.0 + S1.sum(1)) / alpha + jnp.log(1.0 + S2.sum(1)) / alpha)) / n
        loss = loss + lg
    return loss


if __name__ == "__main__":
    key = jax.random.PRNGKey(0)
    k_emb, k_train, k_test, k_samp = jax.random.split(key, 4)

    # NCA_loss has no learned parameters; alpha/beta/ep are constructor scalars.
    alpha, beta, ep = 5.0, 10.0, 0.5

    num_ent, dim = 64, 32
    n_train, n_test = 16, 4800   # forward hard-codes sampling 4500 test links

    emb = jax.random.normal(k_emb, (num_ent, dim), dtype=jnp.float32)
    train_links = jax.random.randint(k_train, (n_train, 2), 0, num_ent, dtype=jnp.int32)
    test_links = jax.random.randint(k_test, (n_test, 2), 0, num_ent, dtype=jnp.int32)

    # Branch 1: len(test_links) == 0
    loss_empty = nca_loss(emb, train_links, jnp.zeros((0, 2), jnp.int32),
                          alpha=alpha, beta=beta, ep=ep)
    jax.block_until_ready(loss_empty)
    ref_empty = nca_loss_ref(emb, train_links, None, alpha, beta, ep)

    # Branch 2: with test_links (global negatives)
    loss_full = nca_loss(emb, train_links, test_links,
                         alpha=alpha, beta=beta, ep=ep, sample_key=k_samp)
    jax.block_until_ready(loss_full)
    perm = jax.random.permutation(k_samp, n_test)[:4500]
    ref_full = nca_loss_ref(emb, train_links, test_links[perm], alpha, beta, ep)

    ok = (bool(jnp.allclose(loss_empty, ref_empty, rtol=2e-2, atol=1e-2))
          and bool(jnp.allclose(loss_full, ref_full, rtol=2e-2, atol=1e-2)))
    if ok:
        print("KERNEL_OK")
    else:
        print("MISMATCH", float(loss_empty), float(ref_empty),
              float(loss_full), float(ref_full))
</pallas_src>

<mosaic_0001>
module attributes {stable_mosaic.version = 11 : i64} {
  func.func @_l2_normalize_kernel(%arg0: i32, %arg1: memref<128x128xf32, #tpu.memory_space<vmem>>, %arg2: memref<128x128xf32, #tpu.memory_space<vmem>>) attributes {dimension_semantics = [#tpu.dimension_semantics<parallel>], iteration_bounds = array<i64: 1>, scalar_prefetch = 0 : i64, scratch_operands = 0 : i64, tpu.core_type = #tpu.core_type<tc>, window_params = [{transform_indices = @transform_0, window_bounds = array<i64: 128, 128>}, {transform_indices = @transform_1, window_bounds = array<i64: 128, 128>}]} {
    %c0 = arith.constant 0 : index
    %c0_0 = arith.constant 0 : index
    %0 = vector.load %arg1[%c0, %c0_0] : memref<128x128xf32, #tpu.memory_space<vmem>>, vector<128x128xf32>
    %1 = arith.mulf %0, %0 : vector<128x128xf32>
    %cst = arith.constant dense<0.000000e+00> : vector<128xf32>
    %2 = vector.multi_reduction <add>, %1, %cst [1] : vector<128x128xf32> to vector<128xf32>
    %3 = vector.shape_cast %2 : vector<128xf32> to vector<128x1xf32>
    %cst_1 = arith.constant 1.000000e-24 : f32
    %4 = vector.broadcast %cst_1 : f32 to vector<128x1xf32>
    %5 = arith.maximumf %3, %4 : vector<128x1xf32>
    %6 = math.rsqrt %5 : vector<128x1xf32>
    %7 = vector.broadcast %6 : vector<128x1xf32> to vector<128x128xf32>
    %8 = arith.mulf %0, %7 : vector<128x128xf32>
    %c0_2 = arith.constant 0 : index
    %c0_3 = arith.constant 0 : index
    %9 = vector.load %arg2[%c0_2, %c0_3] : memref<128x128xf32, #tpu.memory_space<vmem>>, vector<128x128xf32>
    tpu.vector_store %arg2[%c0_2, %c0_3], %8 {strides = array<i32>} : memref<128x128xf32, #tpu.memory_space<vmem>>, vector<128x128xf32>,
    return
  }
  func.func @transform_0(%arg0: i32) -> (i32, i32) {
    %c0_i32 = arith.constant 0 : i32
    %c0_i32_0 = arith.constant 0 : i32
    return %arg0, %c0_i32 : i32, i32
  }
  func.func @transform_1(%arg0: i32) -> (i32, i32) {
    %c0_i32 = arith.constant 0 : i32
    %c0_i32_0 = arith.constant 0 : i32
    return %arg0, %c0_i32 : i32, i32
  }
}

</mosaic_0001>

<llo_original>
// kernel: tpu_custom_call.1
$region0: #{tpu_custom_call.1}
  #allocation0 [shape = 'u32[]', space=smem, size = 0x4, offset = 0x4, fixed_abs, tag = 'smem constant byte address 0x4 - core index']
  #allocation1 [shape = 'u32[144,128]{1,0:T(1,128)}', space=vmem, size = 0x12000, scoped, tag = 'internal scratch']
  %s0 = inlined_call_operand.hbm [shape: f32[128,128], index: 0, kind: input, shape index: {}]
  %s1 = inlined_call_operand.hbm [shape: f32[128,128], index: 1, kind: output, shape index: {}]
  %s2 = sld [smem:[#allocation0]]
  $region18: #{tpu_custom_call.1} parent=0
    _
  %s4 = ssub.s32 1, %s2
  %s5 = scalar_select 0, %s4, %s2
  $region1: #{tpu_custom_call.1} parent=0
    #allocation2 [shape = 'u8[65536]{0}', space=vmem, size = 0x10000, scoped, tag = 'input window, operand 0, single buffered']
    #allocation3 [shape = 's32[1]{0}', space=sflag, size = 0x4, scoped, tag = 'scoped memory for tpu_custom_call.1']
    #allocation4 [shape = 's32[1]{0}', space=sflag, size = 0x4, scoped, tag = 'scoped memory for tpu_custom_call.1']
    #allocation5 [shape = 'u8[65536]{0}', space=vmem, size = 0x10000, scoped, tag = 'output window, operand 0, single buffered']
    %6 = vsyncpa [#allocation3], 0
    %7 = vsyncpa [#allocation4], 0
    // Predicated region
    $region2: #{tpu_custom_call.1} parent=1 // pred_check
      _
    $region3: #{tpu_custom_call.1} parent=1 // pred_check_branch
      %9 = sbr.rel (0) target = $region5
    $region4: #{tpu_custom_call.1} parent=1 // pred_region
      %s11 = ssub.s32 2048, 2048
      %12 = vsyncadd [#allocation3], %s11
      %s13 = sshll.u32 [#allocation2], 4
      %s14 = int_to_ptr.vmem [resolvable:$true] %s13
      %19 = dma.hbm_to_vmem [thread:$0]  %s0, 2048, %s14, [#allocation3], 128, 128, 8
    $region5: #{tpu_custom_call.1} parent=1 // pred_fallthru
      _
    // Predicated region
    $region6: #{tpu_custom_call.1} parent=1 // pred_check
      _
    $region7: #{tpu_custom_call.1} parent=1 // pred_check_branch
      %21 = sbr.rel (0) target = $region9
    $region8: #{tpu_custom_call.1} parent=1 // pred_region
      %22 = dma.done [#allocation3], 2048
    $region9: #{tpu_custom_call.1} parent=1 // pred_fallthru
      _
    %v23 = vld [vmem:[#allocation2] sm:$0xff]
    %v24 = vld [vmem:[#allocation2 + $0x8] sm:$0xff]
    %v25 = vld [vmem:[#allocation2 + $0x10] sm:$0xff]
    %v26 = vld [vmem:[#allocation2 + $0x18] sm:$0xff]
    %v27 = vld [vmem:[#allocation2 + $0x20] sm:$0xff]
    %v28 = vld [vmem:[#allocation2 + $0x28] sm:$0xff]
    %v29 = vld [vmem:[#allocation2 + $0x30] sm:$0xff]
    %v30 = vld [vmem:[#allocation2 + $0x38] sm:$0xff]
    %v31 = vld [vmem:[#allocation2 + $0x40] sm:$0xff]
    %v32 = vld [vmem:[#allocation2 + $0x48] sm:$0xff]
    %v33 = vld [vmem:[#allocation2 + $0x50] sm:$0xff]
    %v34 = vld [vmem:[#allocation2 + $0x58] sm:$0xff]
    %v35 = vld [vmem:[#allocation2 + $0x60] sm:$0xff]
    %v36 = vld [vmem:[#allocation2 + $0x68] sm:$0xff]
    %v37 = vld [vmem:[#allocation2 + $0x70] sm:$0xff]
    %v38 = vld [vmem:[#allocation2 + $0x78] sm:$0xff]
    %v39 = vmul.f32 %v23, %v23
    %v40 = vmul.f32 %v24, %v24
    %v41 = vmul.f32 %v25, %v25
    %v42 = vmul.f32 %v26, %v26
    %v43 = vmul.f32 %v27, %v27
    %v44 = vmul.f32 %v28, %v28
    %v45 = vmul.f32 %v29, %v29
    %v46 = vmul.f32 %v30, %v30
    %v47 = vmul.f32 %v31, %v31
    %v48 = vmul.f32 %v32, %v32
    %v49 = vmul.f32 %v33, %v33
    %v50 = vmul.f32 %v34, %v34
    %v51 = vmul.f32 %v35, %v35
    %v52 = vmul.f32 %v36, %v36
    %v53 = vmul.f32 %v37, %v37
    %v54 = vmul.f32 %v38, %v38
    %55 = vadd.xlane.f32.xlu0 %v39
    %v56 = vpop.xlane.xlu0 %55
    %57 = vadd.xlane.f32.xlu0 %v40
    %v58 = vpop.xlane.xlu0 %57
    %59 = vadd.xlane.f32.xlu0 %v41
    %v60 = vpop.xlane.xlu0 %59
    %61 = vadd.xlane.f32.xlu0 %v42
    %v62 = vpop.xlane.xlu0 %61
    %63 = vadd.xlane.f32.xlu0 %v43
    %v64 = vpop.xlane.xlu0 %63
    %65 = vadd.xlane.f32.xlu0 %v44
    %v66 = vpop.xlane.xlu0 %65
    %67 = vadd.xlane.f32.xlu0 %v45
    %v68 = vpop.xlane.xlu0 %67
    %69 = vadd.xlane.f32.xlu0 %v46
    %v70 = vpop.xlane.xlu0 %69
    %71 = vadd.xlane.f32.xlu0 %v47
    %v72 = vpop.xlane.xlu0 %71
    %73 = vadd.xlane.f32.xlu0 %v48
    %v74 = vpop.xlane.xlu0 %73
    %75 = vadd.xlane.f32.xlu0 %v49
    %v76 = vpop.xlane.xlu0 %75
    %77 = vadd.xlane.f32.xlu0 %v50
    %v78 = vpop.xlane.xlu0 %77
    %79 = vadd.xlane.f32.xlu0 %v51
    %v80 = vpop.xlane.xlu0 %79
    %81 = vadd.xlane.f32.xlu0 %v52
    %v82 = vpop.xlane.xlu0 %81
    %83 = vadd.xlane.f32.xlu0 %v53
    %v84 = vpop.xlane.xlu0 %83
    %85 = vadd.xlane.f32.xlu0 %v54
    %v86 = vpop.xlane.xlu0 %85
    %v87 = vmax.f32 %v56, 1e-24
    %v88 = vmax.f32 %v58, 1e-24
    %v89 = vmax.f32 %v60, 1e-24
    %v90 = vmax.f32 %v62, 1e-24
    %v91 = vmax.f32 %v64, 1e-24
    %v92 = vmax.f32 %v66, 1e-24
    %v93 = vmax.f32 %v68, 1e-24
    %v94 = vmax.f32 %v70, 1e-24
    %v95 = vmax.f32 %v72, 1e-24
    %v96 = vmax.f32 %v74, 1e-24
    %v97 = vmax.f32 %v76, 1e-24
    %v98 = vmax.f32 %v78, 1e-24
    %v99 = vmax.f32 %v80, 1e-24
    %v100 = vmax.f32 %v82, 1e-24
    %v101 = vmax.f32 %v84, 1e-24
    %v102 = vmax.f32 %v86, 1e-24
    %v103 = vrsqrt.pop %v87
    %v104 = vrsqrt.pop %v88
    %v105 = vrsqrt.pop %v89
    %v106 = vrsqrt.pop %v90
    %v107 = vrsqrt.pop %v91
    %v108 = vrsqrt.pop %v92
    %v109 = vrsqrt.pop %v93
    %v110 = vrsqrt.pop %v94
    %v111 = vrsqrt.pop %v95
    %v112 = vrsqrt.pop %v96
    %v113 = vrsqrt.pop %v97
    %v114 = vrsqrt.pop %v98
    %v115 = vrsqrt.pop %v99
    %v116 = vrsqrt.pop %v100
    %v117 = vrsqrt.pop %v101
    %v118 = vrsqrt.pop %v102
    %v119 = vmul.f32 %v23, %v103
    %v120 = vmul.f32 %v24, %v104
    %v121 = vmul.f32 %v25, %v105
    %v122 = vmul.f32 %v26, %v106
    %v123 = vmul.f32 %v27, %v107
    %v124 = vmul.f32 %v28, %v108
    %v125 = vmul.f32 %v29, %v109
    %v126 = vmul.f32 %v30, %v110
    %v127 = vmul.f32 %v31, %v111
    %v128 = vmul.f32 %v32, %v112
    %v129 = vmul.f32 %v33, %v113
    %v130 = vmul.f32 %v34, %v114
    %v131 = vmul.f32 %v35, %v115
    %v132 = vmul.f32 %v36, %v116
    %v133 = vmul.f32 %v37, %v117
    %v134 = vmul.f32 %v38, %v118
    %135 = vst [vmem:[#allocation5] sm:$0xff] %v119
    %136 = vst [vmem:[#allocation5 + $0x8] sm:$0xff] %v120
    %137 = vst [vmem:[#allocation5 + $0x10] sm:$0xff] %v121
    %138 = vst [vmem:[#allocation5 + $0x18] sm:$0xff] %v122
    %139 = vst [vmem:[#allocation5 + $0x20] sm:$0xff] %v123
    %140 = vst [vmem:[#allocation5 + $0x28] sm:$0xff] %v124
    %141 = vst [vmem:[#allocation5 + $0x30] sm:$0xff] %v125
    %142 = vst [vmem:[#allocation5 + $0x38] sm:$0xff] %v126
    %143 = vst [vmem:[#allocation5 + $0x40] sm:$0xff] %v127
    %144 = vst [vmem:[#allocation5 + $0x48] sm:$0xff] %v128
    %145 = vst [vmem:[#allocation5 + $0x50] sm:$0xff] %v129
    %146 = vst [vmem:[#allocation5 + $0x58] sm:$0xff] %v130
    %147 = vst [vmem:[#allocation5 + $0x60] sm:$0xff] %v131
    %148 = vst [vmem:[#allocation5 + $0x68] sm:$0xff] %v132
    %149 = vst [vmem:[#allocation5 + $0x70] sm:$0xff] %v133
    %150 = vst [vmem:[#allocation5 + $0x78] sm:$0xff] %v134
    // Predicated region
    $region10: #{tpu_custom_call.1} parent=1 // pred_check
      _
    $region11: #{tpu_custom_call.1} parent=1 // pred_check_branch
      %152 = sbr.rel (0) target = $region13
    $region12: #{tpu_custom_call.1} parent=1 // pred_region
      %s154 = ssub.s32 2048, 2048
      %155 = vsyncadd [#allocation4], %s154
      %s156 = sshll.u32 [#allocation5], 4
      %s157 = int_to_ptr.vmem [resolvable:$true] %s156
      %162 = dma.vmem_to_hbm [thread:$0]  %s157, 2048, %s1, [#allocation4], 128, 128, 8
    $region13: #{tpu_custom_call.1} parent=1 // pred_fallthru
      _
    // Predicated region
    $region14: #{tpu_custom_call.1} parent=1 // pred_check
      _
    $region15: #{tpu_custom_call.1} parent=1 // pred_check_branch
      %164 = sbr.rel (0) target = $region17
    $region16: #{tpu_custom_call.1} parent=1 // pred_region
      %165 = dma.done [#allocation4], 2048
    $region17: #{tpu_custom_call.1} parent=1 // pred_fallthru
      _
    %166 = vsyncpa [#allocation3], 1
    %167 = vsyncpa [#allocation4], 1

</llo_original>
